<compile_context>
chip_gen: v7x
topology: tpu7x:2x2x1
jax: 0.10.0
libtpu: 0.0.40
codegen_flags: <defaults>
</compile_context>

<pallas_src>
import math
import jax
import jax.numpy as jnp
from jax.experimental import pallas as pl
from jax.experimental.pallas import tpu as pltpu

D_MODEL = 32
N_HEADS = 4
HEAD_DIM = D_MODEL // N_HEADS
D_FF = 64
EPS = 1e-5  # nn.LayerNorm default eps


def _layernorm(x, gamma, beta):
    mean = jnp.mean(x, axis=-1, keepdims=True)
    var = jnp.mean((x - mean) ** 2, axis=-1, keepdims=True)
    return (x - mean) * jax.lax.rsqrt(var + EPS) * gamma + beta


def transformer_block_kernel(x_ref, w_attn_ref, w1_ref, w2_ref, c_ref, o_ref):
    R, D = x_ref.shape                          # R = batch_block * S rows (flattened)
    H = N_HEADS

    xf = x_ref[...]                             # (R, D) f32 — no in-kernel reshape
    x_bf = xf.astype(jnp.bfloat16)

    # ----- packed parameters (bf16 weights, f32 vectors / masks) -----
    w_attn = w_attn_ref[...]                    # (D, 4D) bf16 = [wq*scale | wk | wv | wo]
    wqkv = w_attn[:, :3 * D]
    wo = w_attn[:, 3 * D:]

    c = c_ref[...]                              # (8 + H + R, 128) f32 constant slab
    bqkv = c[0:1, :3 * D]
    bo = c[1:2, :D]
    g1 = c[2:3, :D]
    be1 = c[3:4, :D]
    b1 = c[4:5, :D_FF]
    b2 = c[5:6, :D]
    g2 = c[6:7, :D]
    be2 = c[7:8, :D]
    hmask = c[8:8 + H, :D]                      # (H, D) block-diagonal head-lane mask
    bias = c[8 + H:8 + H + R, :R]               # (R, R) causal + same-batch additive mask

    # ----- fused QKV projection: one MXU push of lane width 3D (bf16 in, f32 acc) -----
    qkv = jnp.dot(x_bf, wqkv, preferred_element_type=jnp.float32) + bqkv   # (R, 3D)
    q = qkv[:, :D]                              # 1/sqrt(head_dim) already folded in
    k = qkv[:, D:2 * D]
    v = qkv[:, 2 * D:]

    # ----- head-batched causal attention -----
    # Head h of q3/v3 is q/v with lanes outside head h zeroed (one broadcast multiply);
    # a full-D contraction then reproduces per-head attention, and masking V makes the
    # head recombination a plain sum over the head axis (disjoint lane blocks).
    hm = hmask[:, None, :]                                  # (H, 1, D)
    q3 = (q[None, :, :] * hm).astype(jnp.bfloat16)          # (H, R, D)
    v3 = (v[None, :, :] * hm).astype(jnp.bfloat16)          # (H, R, D)
    k3 = jnp.broadcast_to(k.astype(jnp.bfloat16)[None], (H, R, D))

    # TODO(synk): at production d_model/seq, tile the sequence dim with key tiles >=128
    # lanes, pre-transpose K once per tile, keep attention intermediates in bf16 on
    # v6e/v7x, and set vmem_limit_bytes against v7x's 64 MiB VMEM / 32 MiB scoped default.
    scores = jnp.einsum("hid,hjd->hij", q3, k3,
                        preferred_element_type=jnp.float32)               # (H, R, R)
    scores = scores + bias[None]                # -1e30 outside (same batch & causal)
    scores = scores - jnp.max(scores, axis=-1, keepdims=True)
    p = jnp.exp(scores)
    denom = jnp.sum(p, axis=-1, keepdims=True)
    r = pl.reciprocal(denom, approx=True)       # EUP slot, off the VALU path
    r = r * (2.0 - denom * r)                   # one Newton step -> near-f32 accuracy
    p = (p * r).astype(jnp.bfloat16)

    ctx = jnp.einsum("hij,hjd->hid", p, v3,
                     preferred_element_type=jnp.float32)                  # (H, R, D)
    attn = jnp.sum(ctx, axis=0)                 # (R, D): head recombine = add-reduce

    # ----- output projection, residual + LayerNorm 1 (f32 elementwise) -----
    attn = jnp.dot(attn.astype(jnp.bfloat16), wo,
                   preferred_element_type=jnp.float32) + bo
    x1 = _layernorm(xf + attn, g1, be1)

    # ----- feed-forward (Linear -> ReLU -> Linear), residual + LayerNorm 2 -----
    h1 = jnp.maximum(
        jnp.dot(x1.astype(jnp.bfloat16), w1_ref[...],
                preferred_element_type=jnp.float32) + b1, 0.0)
    ff = jnp.dot(h1.astype(jnp.bfloat16), w2_ref[...],
                 preferred_element_type=jnp.float32) + b2
    out = _layernorm(x1 + ff, g2, be2)

    o_ref[...] = out                            # (R, D): no in-kernel output reshape


def _pack_params(params, rows, seq_len):
    """Fuse parameters + grid-invariant masks into 4 arrays (5 input DMAs total).

    Returns:
      w_attn: (D, 4D) bf16 = [wq*scale | wk | wv | wo]  (score scale folded into Q path)
      w1:     (D, D_FF) bf16
      w2:     (D_FF, D) bf16
      consts: (8 + H + rows, 128) f32 slab:
        rows 0..7      biases / LayerNorm vectors
        rows 8..8+H-1  block-diagonal head-lane mask
        rows 8+H..     additive causal + same-batch mask (0 / -1e30) over the row block
    """
    D, H, HD = D_MODEL, N_HEADS, HEAD_DIM
    scale = 1.0 / math.sqrt(HD)

    w_attn = jnp.concatenate(
        [params["wq"] * scale, params["wk"], params["wv"], params["wo"]],
        axis=1).astype(jnp.bfloat16)                                       # (D, 4D)
    w1 = params["w1"].astype(jnp.bfloat16)
    w2 = params["w2"].astype(jnp.bfloat16)

    consts = jnp.zeros((8 + H + rows, 128), jnp.float32)
    bqkv = jnp.concatenate(
        [params["bq"] * scale, params["bk"], params["bv"]], axis=1)[0]
    consts = consts.at[0, :3 * D].set(bqkv)
    consts = consts.at[1, :D].set(params["bo"][0])
    consts = consts.at[2, :D].set(params["g1"][0])
    consts = consts.at[3, :D].set(params["be1"][0])
    consts = consts.at[4, :D_FF].set(params["b1"][0])
    consts = consts.at[5, :D].set(params["b2"][0])
    consts = consts.at[6, :D].set(params["g2"][0])
    consts = consts.at[7, :D].set(params["be2"][0])

    lane = jnp.arange(D)
    head_mask = (lane[None, :] // HD == jnp.arange(H)[:, None]).astype(jnp.float32)
    consts = consts.at[8:8 + H, :D].set(head_mask)

    rr = jnp.arange(rows)
    b_id, pos = rr // seq_len, rr % seq_len
    valid = (b_id[:, None] == b_id[None, :]) & (pos[None, :] <= pos[:, None])
    attn_bias = jnp.where(valid, 0.0, -1e30).astype(jnp.float32)
    consts = consts.at[8 + H:, :rows].set(attn_bias)

    return w_attn, w1, w2, consts


def transformer_block(x, params, *, batch_block=None):
    """Fused TransformerBlock forward.

    Default: the whole batch runs in ONE grid step (single TensorCore).  Only shard the
    batch axis (batch_block < B) when each core would get >= ~512 matmul rows — at small
    B*S the per-step pipeline overhead and duplicated weight DMAs make a multi-core split
    (including v7x's 2 TCs) a net loss.
    """
    B, S, D = x.shape
    assert D == D_MODEL
    if batch_block is None:
        batch_block = B
    assert B % batch_block == 0
    rows = batch_block * S
    assert rows % 8 == 0 and rows <= 128   # attn-bias block must fit the 128-lane slab

    w_attn, w1, w2, consts = _pack_params(params, rows, S)

    x2 = x.reshape(B * S, D)               # free: row-major HBM layout is unchanged
    out2 = pl.pallas_call(
        transformer_block_kernel,
        out_shape=jax.ShapeDtypeStruct((B * S, D), jnp.float32),
        grid=(B // batch_block,),
        in_specs=[
            pl.BlockSpec((rows, D), lambda i: (i, 0)),
            pl.BlockSpec(w_attn.shape, lambda i: (0, 0)),
            pl.BlockSpec(w1.shape, lambda i: (0, 0)),
            pl.BlockSpec(w2.shape, lambda i: (0, 0)),
            pl.BlockSpec(consts.shape, lambda i: (0, 0)),
        ],
        # NOTE: d_model=32 < 128 lanes so this store is masked; making it lane-dense
        # would require an in-kernel relayout reshape that costs more at this size.
        # At production d_model >= 128 the same spec becomes lane-dense automatically.
        out_specs=pl.BlockSpec((rows, D), lambda i: (i, 0)),
        compiler_params=pltpu.CompilerParams(dimension_semantics=("parallel",)),
    )(x2, w_attn, w1, w2, consts)
    return out2.reshape(B, S, D)


def init_params(key):
    ks = jax.random.split(key, 8)
    scale = 0.05
    return {
        # linear weights stored as (in, out) == transpose of nn.Linear.weight
        "wq": scale * jax.random.normal(ks[0], (D_MODEL, D_MODEL), jnp.float32),
        "wk": scale * jax.random.normal(ks[1], (D_MODEL, D_MODEL), jnp.float32),
        "wv": scale * jax.random.normal(ks[2], (D_MODEL, D_MODEL), jnp.float32),
        "wo": scale * jax.random.normal(ks[3], (D_MODEL, D_MODEL), jnp.float32),
        "bq": scale * jax.random.normal(ks[4], (1, D_MODEL), jnp.float32),
        "bk": scale * jax.random.normal(ks[5], (1, D_MODEL), jnp.float32),
        "bv": scale * jax.random.normal(ks[6], (1, D_MODEL), jnp.float32),
        "bo": jnp.zeros((1, D_MODEL), jnp.float32),
        "g1": jnp.ones((1, D_MODEL), jnp.float32),
        "be1": jnp.zeros((1, D_MODEL), jnp.float32),
        "w1": scale * jax.random.normal(ks[7], (D_MODEL, D_FF), jnp.float32),
        "b1": jnp.zeros((1, D_FF), jnp.float32),
        "w2": scale * jax.random.normal(jax.random.fold_in(key, 99),
                                        (D_FF, D_MODEL), jnp.float32),
        "b2": jnp.zeros((1, D_MODEL), jnp.float32),
        "g2": jnp.ones((1, D_MODEL), jnp.float32),
        "be2": jnp.zeros((1, D_MODEL), jnp.float32),
    }


def reference_forward(x, p):
    """Pure-JAX f32 reference mirroring the PyTorch module."""
    B, S, D = x.shape
    q = x @ p["wq"] + p["bq"]
    k = x @ p["wk"] + p["bk"]
    v = x @ p["wv"] + p["bv"]

    def split(t):  # (B,S,D) -> (B,H,S,hd)
        return t.reshape(B, S, N_HEADS, HEAD_DIM).transpose(0, 2, 1, 3)

    qh, kh, vh = split(q), split(k), split(v)
    scores = jnp.einsum("bhsd,bhtd->bhst", qh, kh) / math.sqrt(HEAD_DIM)
    mask = jnp.triu(jnp.ones((S, S), bool), k=1)
    scores = jnp.where(mask, -jnp.inf, scores)
    attn = jax.nn.softmax(scores, axis=-1)
    out = jnp.einsum("bhst,bhtd->bhsd", attn, vh)
    out = out.transpose(0, 2, 1, 3).reshape(B, S, D)
    out = out @ p["wo"] + p["bo"]

    x1 = _layernorm(x + out, p["g1"], p["be1"])
    ff = jnp.maximum(x1 @ p["w1"] + p["b1"], 0.0) @ p["w2"] + p["b2"]
    return _layernorm(x1 + ff, p["g2"], p["be2"])


if __name__ == "__main__":
    key = jax.random.PRNGKey(0)
    kx, kp = jax.random.split(key)
    B, S = 2, 8
    x = jax.random.normal(kx, (B, S, D_MODEL), jnp.float32)
    params = init_params(kp)

    out = jax.block_until_ready(transformer_block(x, params))
    ref = reference_forward(x, params)

    assert out.shape == (B, S, D_MODEL)
    # Tolerance budget: bf16 MXU operands (with f32 accumulation) dominate the error vs
    # the pure-f32 reference; the approximate reciprocal is corrected by one Newton step
    # so it contributes essentially nothing.
    assert jnp.allclose(out, ref, atol=1e-2, rtol=1e-2), "mismatch vs reference"
    print("KERNEL_OK")
</pallas_src>

<mosaic_0001>
module attributes {stable_mosaic.version = 11 : i64} {
  func.func @transformer_block_kernel(%arg0: i32, %arg1: memref<16x32xf32, #tpu.memory_space<vmem>>, %arg2: memref<32x128xbf16, #tpu.memory_space<vmem>>, %arg3: memref<32x64xbf16, #tpu.memory_space<vmem>>, %arg4: memref<64x32xbf16, #tpu.memory_space<vmem>>, %arg5: memref<28x128xf32, #tpu.memory_space<vmem>>, %arg6: memref<16x32xf32, #tpu.memory_space<vmem>>) attributes {dimension_semantics = [#tpu.dimension_semantics<parallel>], iteration_bounds = array<i64: 1>, scalar_prefetch = 0 : i64, scratch_operands = 0 : i64, tpu.core_type = #tpu.core_type<tc>, window_params = [{transform_indices = @transform_0, window_bounds = array<i64: 16, 32>}, {pipeline_mode = #tpu.pipeline_mode<synchronous>, transform_indices = @transform_1, window_bounds = array<i64: 32, 128>}, {pipeline_mode = #tpu.pipeline_mode<synchronous>, transform_indices = @transform_2, window_bounds = array<i64: 32, 64>}, {pipeline_mode = #tpu.pipeline_mode<synchronous>, transform_indices = @transform_3, window_bounds = array<i64: 64, 32>}, {pipeline_mode = #tpu.pipeline_mode<synchronous>, transform_indices = @transform_4, window_bounds = array<i64: 28, 128>}, {transform_indices = @transform_5, window_bounds = array<i64: 16, 32>}]} {
    %c0 = arith.constant 0 : index
    %c0_0 = arith.constant 0 : index
    %0 = vector.load %arg1[%c0, %c0_0] : memref<16x32xf32, #tpu.memory_space<vmem>>, vector<16x32xf32>
    %1 = arith.truncf %0 : vector<16x32xf32> to vector<16x32xbf16>
    %c0_1 = arith.constant 0 : index
    %c0_2 = arith.constant 0 : index
    %2 = vector.load %arg2[%c0_1, %c0_2] : memref<32x128xbf16, #tpu.memory_space<vmem>>, vector<32x128xbf16>
    %3 = vector.extract_strided_slice %2 {offsets = [0, 0], sizes = [32, 96], strides = [1, 1]} : vector<32x128xbf16> to vector<32x96xbf16>
    %4 = vector.extract_strided_slice %2 {offsets = [0, 96], sizes = [32, 32], strides = [1, 1]} : vector<32x128xbf16> to vector<32x32xbf16>
    %c0_3 = arith.constant 0 : index
    %c0_4 = arith.constant 0 : index
    %5 = vector.load %arg5[%c0_3, %c0_4] : memref<28x128xf32, #tpu.memory_space<vmem>>, vector<28x128xf32>
    %6 = vector.extract_strided_slice %5 {offsets = [0, 0], sizes = [1, 96], strides = [1, 1]} : vector<28x128xf32> to vector<1x96xf32>
    %7 = vector.extract_strided_slice %5 {offsets = [1, 0], sizes = [1, 32], strides = [1, 1]} : vector<28x128xf32> to vector<1x32xf32>
    %8 = vector.extract_strided_slice %5 {offsets = [2, 0], sizes = [1, 32], strides = [1, 1]} : vector<28x128xf32> to vector<1x32xf32>
    %9 = vector.extract_strided_slice %5 {offsets = [3, 0], sizes = [1, 32], strides = [1, 1]} : vector<28x128xf32> to vector<1x32xf32>
    %10 = vector.extract_strided_slice %5 {offsets = [4, 0], sizes = [1, 64], strides = [1, 1]} : vector<28x128xf32> to vector<1x64xf32>
    %11 = vector.extract_strided_slice %5 {offsets = [5, 0], sizes = [1, 32], strides = [1, 1]} : vector<28x128xf32> to vector<1x32xf32>
    %12 = vector.extract_strided_slice %5 {offsets = [6, 0], sizes = [1, 32], strides = [1, 1]} : vector<28x128xf32> to vector<1x32xf32>
    %13 = vector.extract_strided_slice %5 {offsets = [7, 0], sizes = [1, 32], strides = [1, 1]} : vector<28x128xf32> to vector<1x32xf32>
    %14 = vector.extract_strided_slice %5 {offsets = [8, 0], sizes = [4, 32], strides = [1, 1]} : vector<28x128xf32> to vector<4x32xf32>
    %15 = vector.extract_strided_slice %5 {offsets = [12, 0], sizes = [16, 16], strides = [1, 1]} : vector<28x128xf32> to vector<16x16xf32>
    %cst = arith.constant dense<0.000000e+00> : vector<16x96xf32>
    %16 = tpu.matmul %1, %3, %cst {dimension_numbers = #tpu.dot_dimension_numbers<[1], [0], [0], [1], [0, 0, 1, 1], [], []>} : vector<16x32xbf16>, vector<32x96xbf16>, vector<16x96xf32> -> vector<16x96xf32>
    %17 = vector.broadcast %6 : vector<1x96xf32> to vector<16x96xf32>
    %18 = arith.addf %16, %17 : vector<16x96xf32>
    %19 = vector.extract_strided_slice %18 {offsets = [0, 0], sizes = [16, 32], strides = [1, 1]} : vector<16x96xf32> to vector<16x32xf32>
    %20 = vector.extract_strided_slice %18 {offsets = [0, 32], sizes = [16, 32], strides = [1, 1]} : vector<16x96xf32> to vector<16x32xf32>
    %21 = vector.extract_strided_slice %18 {offsets = [0, 64], sizes = [16, 32], strides = [1, 1]} : vector<16x96xf32> to vector<16x32xf32>
    %22 = vector.shape_cast %14 : vector<4x32xf32> to vector<4x1x32xf32>
    %23 = vector.shape_cast %19 : vector<16x32xf32> to vector<1x16x32xf32>
    %24 = vector.broadcast %23 : vector<1x16x32xf32> to vector<4x16x32xf32>
    %25 = vector.broadcast %22 : vector<4x1x32xf32> to vector<4x16x32xf32>
    %26 = arith.mulf %24, %25 : vector<4x16x32xf32>
    %27 = arith.truncf %26 : vector<4x16x32xf32> to vector<4x16x32xbf16>
    %28 = vector.shape_cast %21 : vector<16x32xf32> to vector<1x16x32xf32>
    %29 = vector.broadcast %28 : vector<1x16x32xf32> to vector<4x16x32xf32>
    %30 = vector.broadcast %22 : vector<4x1x32xf32> to vector<4x16x32xf32>
    %31 = arith.mulf %29, %30 : vector<4x16x32xf32>
    %32 = arith.truncf %31 : vector<4x16x32xf32> to vector<4x16x32xbf16>
    %33 = arith.truncf %20 : vector<16x32xf32> to vector<16x32xbf16>
    %34 = vector.shape_cast %33 : vector<16x32xbf16> to vector<1x16x32xbf16>
    %35 = vector.shape_cast %34 : vector<1x16x32xbf16> to vector<1x16x32xbf16>
    %36 = vector.broadcast %35 : vector<1x16x32xbf16> to vector<4x16x32xbf16>
    "tpu.trace_start"() <{level = 10 : i32, message = "hid,hjd->hij"}> : () -> ()
    %cst_5 = arith.constant dense<0.000000e+00> : vector<4x16x16xf32>
    %37 = tpu.matmul %27, %36, %cst_5 {dimension_numbers = #tpu.dot_dimension_numbers<[2], [2], [1], [1], [0, 0, 0, 1, 1, 1], [0], [0]>} : vector<4x16x32xbf16>, vector<4x16x32xbf16>, vector<4x16x16xf32> -> vector<4x16x16xf32>
    "tpu.trace_stop"() : () -> ()
    %38 = vector.shape_cast %15 : vector<16x16xf32> to vector<1x16x16xf32>
    %39 = vector.broadcast %38 : vector<1x16x16xf32> to vector<4x16x16xf32>
    %40 = arith.addf %37, %39 : vector<4x16x16xf32>
    %cst_6 = arith.constant dense<0xFF800000> : vector<4x16xf32>
    %41 = vector.multi_reduction <maximumf>, %40, %cst_6 [2] : vector<4x16x16xf32> to vector<4x16xf32>
    %42 = vector.shape_cast %41 : vector<4x16xf32> to vector<4x16x1xf32>
    %43 = vector.broadcast %42 : vector<4x16x1xf32> to vector<4x16x16xf32>
    %44 = arith.subf %40, %43 : vector<4x16x16xf32>
    %45 = math.exp %44 : vector<4x16x16xf32>
    %cst_7 = arith.constant dense<0.000000e+00> : vector<4x16xf32>
    %46 = vector.multi_reduction <add>, %45, %cst_7 [2] : vector<4x16x16xf32> to vector<4x16xf32>
    %47 = vector.shape_cast %46 : vector<4x16xf32> to vector<4x16x1xf32>
    %48 = tpu.reciprocal %47 {approx = true} : vector<4x16x1xf32> -> vector<4x16x1xf32>
    %49 = arith.mulf %47, %48 : vector<4x16x1xf32>
    %cst_8 = arith.constant 2.000000e+00 : f32
    %50 = vector.broadcast %cst_8 : f32 to vector<4x16x1xf32>
    %51 = arith.subf %50, %49 : vector<4x16x1xf32>
    %52 = arith.mulf %48, %51 : vector<4x16x1xf32>
    %53 = vector.broadcast %52 : vector<4x16x1xf32> to vector<4x16x16xf32>
    %54 = arith.mulf %45, %53 : vector<4x16x16xf32>
    %55 = arith.truncf %54 : vector<4x16x16xf32> to vector<4x16x16xbf16>
    "tpu.trace_start"() <{level = 10 : i32, message = "hij,hjd->hid"}> : () -> ()
    %cst_9 = arith.constant dense<0.000000e+00> : vector<4x16x32xf32>
    %56 = tpu.matmul %55, %32, %cst_9 {dimension_numbers = #tpu.dot_dimension_numbers<[2], [1], [1], [2], [0, 0, 0, 1, 1, 2], [0], [0]>} : vector<4x16x16xbf16>, vector<4x16x32xbf16>, vector<4x16x32xf32> -> vector<4x16x32xf32>
    "tpu.trace_stop"() : () -> ()
    %cst_10 = arith.constant dense<0.000000e+00> : vector<16x32xf32>
    %57 = vector.multi_reduction <add>, %56, %cst_10 [0] : vector<4x16x32xf32> to vector<16x32xf32>
    %58 = arith.truncf %57 : vector<16x32xf32> to vector<16x32xbf16>
    %cst_11 = arith.constant dense<0.000000e+00> : vector<16x32xf32>
    %59 = tpu.matmul %58, %4, %cst_11 {dimension_numbers = #tpu.dot_dimension_numbers<[1], [0], [0], [1], [0, 0, 1, 1], [], []>} : vector<16x32xbf16>, vector<32x32xbf16>, vector<16x32xf32> -> vector<16x32xf32>
    %60 = vector.broadcast %7 : vector<1x32xf32> to vector<16x32xf32>
    %61 = arith.addf %59, %60 : vector<16x32xf32>
    %62 = arith.addf %0, %61 : vector<16x32xf32>
    %cst_12 = arith.constant dense<0.000000e+00> : vector<16xf32>
    %63 = vector.multi_reduction <add>, %62, %cst_12 [1] : vector<16x32xf32> to vector<16xf32>
    %64 = vector.shape_cast %63 : vector<16xf32> to vector<16x1xf32>
    %cst_13 = arith.constant 3.200000e+01 : f32
    %65 = vector.broadcast %cst_13 : f32 to vector<16x1xf32>
    %66 = arith.divf %64, %65 : vector<16x1xf32>
    %67 = vector.broadcast %66 : vector<16x1xf32> to vector<16x32xf32>
    %68 = arith.subf %62, %67 : vector<16x32xf32>
    %69 = arith.mulf %68, %68 : vector<16x32xf32>
    %cst_14 = arith.constant dense<0.000000e+00> : vector<16xf32>
    %70 = vector.multi_reduction <add>, %69, %cst_14 [1] : vector<16x32xf32> to vector<16xf32>
    %71 = vector.shape_cast %70 : vector<16xf32> to vector<16x1xf32>
    %cst_15 = arith.constant 3.200000e+01 : f32
    %72 = vector.broadcast %cst_15 : f32 to vector<16x1xf32>
    %73 = arith.divf %71, %72 : vector<16x1xf32>
    %74 = vector.broadcast %66 : vector<16x1xf32> to vector<16x32xf32>
    %75 = arith.subf %62, %74 : vector<16x32xf32>
    %cst_16 = arith.constant 9.99999974E-6 : f32
    %76 = vector.broadcast %cst_16 : f32 to vector<16x1xf32>
    %77 = arith.addf %73, %76 : vector<16x1xf32>
    %78 = math.rsqrt %77 : vector<16x1xf32>
    %79 = vector.broadcast %78 : vector<16x1xf32> to vector<16x32xf32>
    %80 = arith.mulf %75, %79 : vector<16x32xf32>
    %81 = vector.broadcast %8 : vector<1x32xf32> to vector<16x32xf32>
    %82 = arith.mulf %80, %81 : vector<16x32xf32>
    %83 = vector.broadcast %9 : vector<1x32xf32> to vector<16x32xf32>
    %84 = arith.addf %82, %83 : vector<16x32xf32>
    %85 = arith.truncf %84 : vector<16x32xf32> to vector<16x32xbf16>
    %c0_17 = arith.constant 0 : index
    %c0_18 = arith.constant 0 : index
    %86 = vector.load %arg3[%c0_17, %c0_18] : memref<32x64xbf16, #tpu.memory_space<vmem>>, vector<32x64xbf16>
    %cst_19 = arith.constant dense<0.000000e+00> : vector<16x64xf32>
    %87 = tpu.matmul %85, %86, %cst_19 {dimension_numbers = #tpu.dot_dimension_numbers<[1], [0], [0], [1], [0, 0, 1, 1], [], []>} : vector<16x32xbf16>, vector<32x64xbf16>, vector<16x64xf32> -> vector<16x64xf32>
    %88 = vector.broadcast %10 : vector<1x64xf32> to vector<16x64xf32>
    %89 = arith.addf %87, %88 : vector<16x64xf32>
    %cst_20 = arith.constant 0.000000e+00 : f32
    %90 = vector.broadcast %cst_20 : f32 to vector<16x64xf32>
    %91 = arith.maximumf %89, %90 : vector<16x64xf32>
    %92 = arith.truncf %91 : vector<16x64xf32> to vector<16x64xbf16>
    %c0_21 = arith.constant 0 : index
    %c0_22 = arith.constant 0 : index
    %93 = vector.load %arg4[%c0_21, %c0_22] : memref<64x32xbf16, #tpu.memory_space<vmem>>, vector<64x32xbf16>
    %cst_23 = arith.constant dense<0.000000e+00> : vector<16x32xf32>
    %94 = tpu.matmul %92, %93, %cst_23 {dimension_numbers = #tpu.dot_dimension_numbers<[1], [0], [0], [1], [0, 0, 1, 1], [], []>} : vector<16x64xbf16>, vector<64x32xbf16>, vector<16x32xf32> -> vector<16x32xf32>
    %95 = vector.broadcast %11 : vector<1x32xf32> to vector<16x32xf32>
    %96 = arith.addf %94, %95 : vector<16x32xf32>
    %97 = arith.addf %84, %96 : vector<16x32xf32>
    %cst_24 = arith.constant dense<0.000000e+00> : vector<16xf32>
    %98 = vector.multi_reduction <add>, %97, %cst_24 [1] : vector<16x32xf32> to vector<16xf32>
    %99 = vector.shape_cast %98 : vector<16xf32> to vector<16x1xf32>
    %cst_25 = arith.constant 3.200000e+01 : f32
    %100 = vector.broadcast %cst_25 : f32 to vector<16x1xf32>
    %101 = arith.divf %99, %100 : vector<16x1xf32>
    %102 = vector.broadcast %101 : vector<16x1xf32> to vector<16x32xf32>
    %103 = arith.subf %97, %102 : vector<16x32xf32>
    %104 = arith.mulf %103, %103 : vector<16x32xf32>
    %cst_26 = arith.constant dense<0.000000e+00> : vector<16xf32>
    %105 = vector.multi_reduction <add>, %104, %cst_26 [1] : vector<16x32xf32> to vector<16xf32>
    %106 = vector.shape_cast %105 : vector<16xf32> to vector<16x1xf32>
    %cst_27 = arith.constant 3.200000e+01 : f32
    %107 = vector.broadcast %cst_27 : f32 to vector<16x1xf32>
    %108 = arith.divf %106, %107 : vector<16x1xf32>
    %109 = vector.broadcast %101 : vector<16x1xf32> to vector<16x32xf32>
    %110 = arith.subf %97, %109 : vector<16x32xf32>
    %cst_28 = arith.constant 9.99999974E-6 : f32
    %111 = vector.broadcast %cst_28 : f32 to vector<16x1xf32>
    %112 = arith.addf %108, %111 : vector<16x1xf32>
    %113 = math.rsqrt %112 : vector<16x1xf32>
    %114 = vector.broadcast %113 : vector<16x1xf32> to vector<16x32xf32>
    %115 = arith.mulf %110, %114 : vector<16x32xf32>
    %116 = vector.broadcast %12 : vector<1x32xf32> to vector<16x32xf32>
    %117 = arith.mulf %115, %116 : vector<16x32xf32>
    %118 = vector.broadcast %13 : vector<1x32xf32> to vector<16x32xf32>
    %119 = arith.addf %117, %118 : vector<16x32xf32>
    %c0_29 = arith.constant 0 : index
    %c0_30 = arith.constant 0 : index
    %120 = vector.load %arg6[%c0_29, %c0_30] : memref<16x32xf32, #tpu.memory_space<vmem>>, vector<16x32xf32>
    tpu.vector_store %arg6[%c0_29, %c0_30], %119 {strides = array<i32>} : memref<16x32xf32, #tpu.memory_space<vmem>>, vector<16x32xf32>,
    return
  }
  func.func @transform_0(%arg0: i32) -> (i32, i32) {
    %c0_i32 = arith.constant 0 : i32
    %c0_i32_0 = arith.constant 0 : i32
    return %arg0, %c0_i32 : i32, i32
  }
  func.func @transform_1(%arg0: i32) -> (i32, i32) {
    %c0_i32 = arith.constant 0 : i32
    %c0_i32_0 = arith.constant 0 : i32
    %c0_i32_1 = arith.constant 0 : i32
    return %c0_i32, %c0_i32_0 : i32, i32
  }
  func.func @transform_2(%arg0: i32) -> (i32, i32) {
    %c0_i32 = arith.constant 0 : i32
    %c0_i32_0 = arith.constant 0 : i32
    %c0_i32_1 = arith.constant 0 : i32
    return %c0_i32, %c0_i32_0 : i32, i32
  }
  func.func @transform_3(%arg0: i32) -> (i32, i32) {
    %c0_i32 = arith.constant 0 : i32
    %c0_i32_0 = arith.constant 0 : i32
    %c0_i32_1 = arith.constant 0 : i32
    return %c0_i32, %c0_i32_0 : i32, i32
  }
  func.func @transform_4(%arg0: i32) -> (i32, i32) {
    %c0_i32 = arith.constant 0 : i32
    %c0_i32_0 = arith.constant 0 : i32
    %c0_i32_1 = arith.constant 0 : i32
    return %c0_i32, %c0_i32_0 : i32, i32
  }
  func.func @transform_5(%arg0: i32) -> (i32, i32) {
    %c0_i32 = arith.constant 0 : i32
    %c0_i32_0 = arith.constant 0 : i32
    return %arg0, %c0_i32 : i32, i32
  }
}

</mosaic_0001>

<llo_original>
// kernel: tpu_custom_call.1
$region0: #{tpu_custom_call.1}
  #allocation0 [shape = 'u32[]', space=smem, size = 0x4, offset = 0x4, fixed_abs, tag = 'smem constant byte address 0x4 - core index']
  #allocation1 [shape = 'u32[144,128]{1,0:T(1,128)}', space=vmem, size = 0x12000, scoped, tag = 'internal scratch']
  %s0 = inlined_call_operand.vmem [shape: f32[16,32], index: 0, kind: input, shape index: {}]
  %s1 = inlined_call_operand.hbm [shape: bf16[32,128], index: 1, kind: input, shape index: {}]
  %s2 = inlined_call_operand.hbm [shape: bf16[32,64], index: 2, kind: input, shape index: {}]
  %s3 = inlined_call_operand.vmem [shape: bf16[64,32], index: 3, kind: input, shape index: {}]
  %s4 = inlined_call_operand.vmem [shape: f32[28,128], index: 4, kind: input, shape index: {}]
  %s5 = inlined_call_operand.hbm [shape: f32[16,32], index: 5, kind: output, shape index: {}]
  %s6 = sld [smem:[#allocation0]]
  $region38: #{tpu_custom_call.1} parent=0
    _
  %s8 = ssub.s32 1, %s6
  %s9 = scalar_select 0, %s8, %s6
  $region1: #{tpu_custom_call.1} parent=0
    #allocation2 [shape = 'u8[8192]{0}', space=vmem, size = 0x2000, scoped, tag = 'input window, operand 1, single buffered']
    #allocation3 [shape = 's32[1]{0}', space=sflag, size = 0x4, scoped, tag = 'scoped memory for tpu_custom_call.1']
    #allocation4 [shape = 's32[1]{0}', space=sflag, size = 0x4, scoped, tag = 'scoped memory for tpu_custom_call.1']
    #allocation5 [shape = 'u8[8192]{0}', space=vmem, size = 0x2000, scoped, tag = 'input window, operand 2, single buffered']
    #allocation6 [shape = 's32[1]{0}', space=sflag, size = 0x4, scoped, tag = 'scoped memory for tpu_custom_call.1']
    #allocation7 [shape = 'u8[8192]{0}', space=vmem, size = 0x2000, scoped, tag = 'output window, operand 0, single buffered']
    %10 = vsyncpa [#allocation3], 0
    %11 = vsyncpa [#allocation6], 0
    %12 = vsyncpa [#allocation4], 0
    // Predicated region
    $region2: #{tpu_custom_call.1} parent=1 // pred_check
      _
    $region3: #{tpu_custom_call.1} parent=1 // pred_check_branch
      %14 = sbr.rel (0) target = $region5
    $region4: #{tpu_custom_call.1} parent=1 // pred_region
      _
    $region5: #{tpu_custom_call.1} parent=1 // pred_fallthru
      _
    // Predicated region
    $region6: #{tpu_custom_call.1} parent=1 // pred_check
      _
    $region7: #{tpu_custom_call.1} parent=1 // pred_check_branch
      %16 = sbr.rel (0) target = $region9
    $region8: #{tpu_custom_call.1} parent=1 // pred_region
      %s18 = ssub.s32 256, 256
      %19 = vsyncadd [#allocation3], %s18
      %s20 = sshll.u32 [#allocation2], 4
      %s21 = int_to_ptr.vmem [resolvable:$true] %s20
      %26 = dma.hbm_to_vmem [thread:$0]  %s1, 256, %s21, [#allocation3], 64, 64, 4
    $region9: #{tpu_custom_call.1} parent=1 // pred_fallthru
      _
    // Predicated region
    $region10: #{tpu_custom_call.1} parent=1 // pred_check
      _
    $region11: #{tpu_custom_call.1} parent=1 // pred_check_branch
      %28 = sbr.rel (0) target = $region13
    $region12: #{tpu_custom_call.1} parent=1 // pred_region
      %s30 = ssub.s32 256, 256
      %31 = vsyncadd [#allocation6], %s30
      %s32 = sshll.u32 [#allocation5], 4
      %s33 = int_to_ptr.vmem [resolvable:$true] %s32
      %38 = dma.hbm_to_vmem [thread:$0]  %s2, 256, %s33, [#allocation6], 64, 64, 4
    $region13: #{tpu_custom_call.1} parent=1 // pred_fallthru
      _
    // Predicated region
    $region14: #{tpu_custom_call.1} parent=1 // pred_check
      _
    $region15: #{tpu_custom_call.1} parent=1 // pred_check_branch
      %40 = sbr.rel (0) target = $region17
    $region16: #{tpu_custom_call.1} parent=1 // pred_region
      _
    $region17: #{tpu_custom_call.1} parent=1 // pred_fallthru
      _
    // Predicated region
    $region18: #{tpu_custom_call.1} parent=1 // pred_check
      _
    $region19: #{tpu_custom_call.1} parent=1 // pred_check_branch
      %42 = sbr.rel (0) target = $region21
    $region20: #{tpu_custom_call.1} parent=1 // pred_region
      _
    $region21: #{tpu_custom_call.1} parent=1 // pred_fallthru
      _
    // Predicated region
    $region22: #{tpu_custom_call.1} parent=1 // pred_check
      _
    $region23: #{tpu_custom_call.1} parent=1 // pred_check_branch
      %44 = sbr.rel (0) target = $region25
    $region24: #{tpu_custom_call.1} parent=1 // pred_region
      %45 = dma.done [#allocation3], 256
    $region25: #{tpu_custom_call.1} parent=1 // pred_fallthru
      _
    // Predicated region
    $region26: #{tpu_custom_call.1} parent=1 // pred_check
      _
    $region27: #{tpu_custom_call.1} parent=1 // pred_check_branch
      %47 = sbr.rel (0) target = $region29
    $region28: #{tpu_custom_call.1} parent=1 // pred_region
      %48 = dma.done [#allocation6], 256
    $region29: #{tpu_custom_call.1} parent=1 // pred_fallthru
      _
    %v50 = vld [vmem:[%s0] sm:$0xff]
    %v51 = vld [vmem:[%s0 + $0x8] sm:$0xff]
    %v52 = vpack.c.bf16 %v51, %v50
    %v53 = vld [vmem:[#allocation2] sm:$0xf]
    %v54 = vld [vmem:[#allocation2 + $0x4] sm:$0xf]
    %v55 = vld [vmem:[#allocation2 + $0x8] sm:$0xf]
    %v56 = vld [vmem:[#allocation2 + $0xc] sm:$0xf]
    %v57 = vld [vmem:[%s4] sm:$0xff]
    %v58 = vld [vmem:[%s4 + $0x8] sm:$0xff]
    %v59 = vld [vmem:[%s4 + $0x10] sm:$0xff]
    %v60 = vld [vmem:[%s4 + $0x18] sm:$0xf]
    %v61 = vlaneseq
    %v62 = vshrl.u32 %v61, 7
    %v63 = vsub.s32 0, %v62
    %v64 = vrot.slane %v57, %v63
    %v69 = vunpack.c.l.b16 %v53
    %v70 = vunpack.c.l.b16 %v54
    %v71 = vunpack.c.l.b16 %v55
    %v72 = vunpack.c.l.b16 %v56
    %v73 = vpack.c.b16 %v70, %v69
    %v74 = vpack.c.b16 %v72, %v71
    %vm77 = vcmask 261120
    %v79 = vsel %vm77, %v52, 0
    %81 = vmatprep.subr.bf16.mxu0 0
    %82 = vmatpush1.bf16.msra.mxu0 %v73
    %83 = vmatprep.subr.bf16.mxu0 0
    %84 = vmatpush1.bf16.msra.mxu0 %v74
    %85 = vmatprep.subr.bf16.mxu0 0
    %86 = vmatpush1.bf16.msra.mxu0 0
    %87 = vmatprep.subr.bf16.mxu0 0
    %88 = vmatpush1.bf16.msra.mxu0 0
    %89 = vmatprep.subr.bf16.mxu0 0
    %90 = vmatpush1.bf16.msra.mxu0 0
    %91 = vmatprep.subr.bf16.mxu0 0
    %92 = vmatpush1.bf16.msra.mxu0 0
    %93 = vmatprep.subr.bf16.mxu0 0
    %94 = vmatpush1.bf16.msra.mxu0 0
    %95 = vmatprep.subr.bf16.mxu0 0
    %96 = vmatpush1.bf16.msra.mxu0 0
    %97 = vmatprep.subr.bf16.mxu0 0
    %98 = vmatpush1.bf16.msra.mxu0 0
    %99 = vmatprep.subr.bf16.mxu0 0
    %100 = vmatpush1.bf16.msra.mxu0 0
    %101 = vmatprep.subr.bf16.mxu0 0
    %102 = vmatpush1.bf16.msra.mxu0 0
    %103 = vmatprep.subr.bf16.mxu0 0
    %104 = vmatpush1.bf16.msra.mxu0 0
    %105 = vmatprep.subr.bf16.mxu0 0
    %106 = vmatpush1.bf16.msra.mxu0 0
    %107 = vmatprep.subr.bf16.mxu0 0
    %108 = vmatpush1.bf16.msra.mxu0 0
    %109 = vmatprep.subr.bf16.mxu0 0
    %110 = vmatpush1.bf16.msra.mxu0 0
    %111 = vmatprep.subr.bf16.mxu0 0
    %112 = vmatpush1.bf16.msra.mxu0 0
    %113 = vmatprep.mubr.bf16.mxu0 0
    %114 = vmatmul.mubr.bf16.gmra.mrb[0].mxu0 %v79
    %v115 = vpop.f32.mrb[0].mxu0
    %v116 = vadd.f32 %v64, %v115
    %v117 = vpop.f32.mrb[0].mxu0
    %v118 = vpop.f32.mrb[0].mxu0
    %v119 = vadd.f32 %v64, %v118
    %v120 = vpop.f32.mrb[0].mxu0
    %121 = vdwg.mxu0
    %v124 = vunpack.c.l.s4 1966171168
    %v125 = vunpack.c.0.s8 %v124
    %v126 = vlaneseq
    %v127 = vshrl.u32 %v126, 7
    %v128 = vsub.s32 %v125, %v127
    %v129 = vrot.slane %v58, %v128
    %v130 = vcombine.high %v129, %v129
    %v132 = vunpack.c.l.s4 1966171168
    %v133 = vunpack.c.0.s8 %v132
    %v134 = vlaneseq
    %v135 = vshrl.u32 %v134, 7
    %v136 = vsub.s32 %v133, %v135
    %v137 = vrot.slane %v129, %v136
    %v139 = vunpack.c.l.s4 1966171168
    %v140 = vunpack.c.0.s8 %v139
    %v141 = vlaneseq
    %v142 = vshrl.u32 %v141, 7
    %v143 = vsub.s32 %v140, %v142
    %v144 = vrot.slane %v130, %v143
    %v145 = vcombine.high %v137, %v137
    %v146 = vcombine.high %v144, %v144
    %v147 = vlaneseq
    %v148 = vshrl.u32 %v147, 7
    %v149 = vsub.s32 0, %v148
    %v150 = vrot.slane %v137, %v149
    %v151 = vlaneseq
    %v152 = vshrl.u32 %v151, 7
    %v153 = vsub.s32 0, %v152
    %v154 = vrot.slane %v144, %v153
    %v155 = vlaneseq
    %v156 = vshrl.u32 %v155, 7
    %v157 = vsub.s32 0, %v156
    %v158 = vrot.slane %v145, %v157
    %v159 = vlaneseq
    %v160 = vshrl.u32 %v159, 7
    %v161 = vsub.s32 0, %v160
    %v162 = vrot.slane %v146, %v161
    %v167 = vmul.f32 %v116, %v150
    %v168 = vmul.f32 %v119, %v150
    %v169 = vmul.f32 %v116, %v154
    %v170 = vmul.f32 %v119, %v154
    %v171 = vmul.f32 %v116, %v158
    %v172 = vmul.f32 %v119, %v158
    %v173 = vmul.f32 %v116, %v162
    %v174 = vmul.f32 %v119, %v162
    %v175 = vpack.c.bf16 %v168, %v167
    %v176 = vpack.c.bf16 %v170, %v169
    %v177 = vpack.c.bf16 %v172, %v171
    %v178 = vpack.c.bf16 %v174, %v173
    %179 = vrot.lane.b32.xlu0 %v150, 64
    %v180 = vpop.permute.xlu0 %179
    %181 = vrot.lane.b32.xlu0 %v154, 64
    %v182 = vpop.permute.xlu0 %181
    %183 = vrot.lane.b32.xlu0 %v158, 64
    %v184 = vpop.permute.xlu0 %183
    %185 = vrot.lane.b32.xlu0 %v162, 64
    %v186 = vpop.permute.xlu0 %185
    %v191 = vmul.f32 %v116, %v180
    %v192 = vmul.f32 %v119, %v180
    %v193 = vmul.f32 %v116, %v182
    %v194 = vmul.f32 %v119, %v182
    %v195 = vmul.f32 %v116, %v184
    %v196 = vmul.f32 %v119, %v184
    %v197 = vmul.f32 %v116, %v186
    %v198 = vmul.f32 %v119, %v186
    %v199 = vpack.c.bf16 %v192, %v191
    %v200 = vpack.c.bf16 %v194, %v193
    %v201 = vpack.c.bf16 %v196, %v195
    %v202 = vpack.c.bf16 %v198, %v197
    %v203 = vpack.c.bf16 %v119, %v116
    %205 = vrot.lane.b32.xlu0 %v203, 96
    %v206 = vpop.permute.xlu0 %205
    %vm209 = vcmask 1043456
    %v210 = vrot.slane %v58, 4
    %v211 = vrot.slane %v59, 4
    %v212 = vsel %vm209, %v210, %v211
    %v213 = vrot.slane %v60, 4
    %v214 = vsel %vm209, %v211, %v213
    %v218 = vsel %vm77, %v175, 0
    %v221 = vsel %vm77, %v206, 0
    %223 = vmatprep.subr.bf16.mxu0 0
    %224 = vmatpush1.bf16.xpose.msra.mxu0 %v221
    %225 = vmatprep.subr.bf16.mxu0 0
    %226 = vmatpush1.bf16.xpose.msra.mxu0 0
    %227 = vmatprep.subr.bf16.mxu0 0
    %228 = vmatpush1.bf16.xpose.msra.mxu0 0
    %229 = vmatprep.subr.bf16.mxu0 0
    %230 = vmatpush1.bf16.xpose.msra.mxu0 0
    %231 = vmatprep.subr.bf16.mxu0 0
    %232 = vmatpush1.bf16.xpose.msra.mxu0 0
    %233 = vmatprep.subr.bf16.mxu0 0
    %234 = vmatpush1.bf16.xpose.msra.mxu0 0
    %235 = vmatprep.subr.bf16.mxu0 0
    %236 = vmatpush1.bf16.xpose.msra.mxu0 0
    %237 = vmatprep.subr.bf16.mxu0 0
    %238 = vmatpush1.bf16.xpose.msra.mxu0 0
    %239 = vmatprep.subr.bf16.mxu0 0
    %240 = vmatpush1.bf16.xpose.msra.mxu0 0
    %241 = vmatprep.subr.bf16.mxu0 0
    %242 = vmatpush1.bf16.xpose.msra.mxu0 0
    %243 = vmatprep.subr.bf16.mxu0 0
    %244 = vmatpush1.bf16.xpose.msra.mxu0 0
    %245 = vmatprep.subr.bf16.mxu0 0
    %246 = vmatpush1.bf16.xpose.msra.mxu0 0
    %247 = vmatprep.subr.bf16.mxu0 0
    %248 = vmatpush1.bf16.xpose.msra.mxu0 0
    %249 = vmatprep.subr.bf16.mxu0 0
    %250 = vmatpush1.bf16.xpose.msra.mxu0 0
    %251 = vmatprep.subr.bf16.mxu0 0
    %252 = vmatpush1.bf16.xpose.msra.mxu0 0
    %253 = vmatprep.subr.bf16.mxu0 0
    %254 = vmatpush1.bf16.xpose.msra.mxu0 0
    %255 = vmatprep.mubr.bf16.mxu0 0
    %256 = vmatmul.mubr.bf16.gmra.mrb[0].mxu0 %v218
    %v257 = vpop.f32.mrb[0].mxu0
    %v258 = vadd.f32 %v212, %v257
    %v259 = vpop.f32.mrb[0].mxu0
    %v260 = vpop.f32.mrb[0].mxu0
    %v261 = vadd.f32 %v214, %v260
    %v262 = vpop.f32.mrb[0].mxu0
    %263 = vdwg.mxu0
    %v265 = vsel %vm77, %v176, 0
    %267 = vmatprep.subr.bf16.mxu0 0
    %268 = vmatpush1.bf16.xpose.msra.mxu0 %v221
    %269 = vmatprep.subr.bf16.mxu0 0
    %270 = vmatpush1.bf16.xpose.msra.mxu0 0
    %271 = vmatprep.subr.bf16.mxu0 0
    %272 = vmatpush1.bf16.xpose.msra.mxu0 0
    %273 = vmatprep.subr.bf16.mxu0 0
    %274 = vmatpush1.bf16.xpose.msra.mxu0 0
    %275 = vmatprep.subr.bf16.mxu0 0
    %276 = vmatpush1.bf16.xpose.msra.mxu0 0
    %277 = vmatprep.subr.bf16.mxu0 0
    %278 = vmatpush1.bf16.xpose.msra.mxu0 0
    %279 = vmatprep.subr.bf16.mxu0 0
    %280 = vmatpush1.bf16.xpose.msra.mxu0 0
    %281 = vmatprep.subr.bf16.mxu0 0
    %282 = vmatpush1.bf16.xpose.msra.mxu0 0
    %283 = vmatprep.subr.bf16.mxu0 0
    %284 = vmatpush1.bf16.xpose.msra.mxu0 0
    %285 = vmatprep.subr.bf16.mxu0 0
    %286 = vmatpush1.bf16.xpose.msra.mxu0 0
    %287 = vmatprep.subr.bf16.mxu0 0
    %288 = vmatpush1.bf16.xpose.msra.mxu0 0
    %289 = vmatprep.subr.bf16.mxu0 0
    %290 = vmatpush1.bf16.xpose.msra.mxu0 0
    %291 = vmatprep.subr.bf16.mxu0 0
    %292 = vmatpush1.bf16.xpose.msra.mxu0 0
    %293 = vmatprep.subr.bf16.mxu0 0
    %294 = vmatpush1.bf16.xpose.msra.mxu0 0
    %295 = vmatprep.subr.bf16.mxu0 0
    %296 = vmatpush1.bf16.xpose.msra.mxu0 0
    %297 = vmatprep.subr.bf16.mxu0 0
    %298 = vmatpush1.bf16.xpose.msra.mxu0 0
    %299 = vmatprep.mubr.bf16.mxu0 0
    %300 = vmatmul.mubr.bf16.gmra.mrb[0].mxu0 %v265
    %v301 = vpop.f32.mrb[0].mxu0
    %v302 = vadd.f32 %v212, %v301
    %v303 = vpop.f32.mrb[0].mxu0
    %v304 = vpop.f32.mrb[0].mxu0
    %v305 = vadd.f32 %v214, %v304
    %v306 = vpop.f32.mrb[0].mxu0
    %307 = vdwg.mxu0
    %v309 = vsel %vm77, %v177, 0
    %311 = vmatprep.subr.bf16.mxu0 0
    %312 = vmatpush1.bf16.xpose.msra.mxu0 %v221
    %313 = vmatprep.subr.bf16.mxu0 0
    %314 = vmatpush1.bf16.xpose.msra.mxu0 0
    %315 = vmatprep.subr.bf16.mxu0 0
    %316 = vmatpush1.bf16.xpose.msra.mxu0 0
    %317 = vmatprep.subr.bf16.mxu0 0
    %318 = vmatpush1.bf16.xpose.msra.mxu0 0
    %319 = vmatprep.subr.bf16.mxu0 0
    %320 = vmatpush1.bf16.xpose.msra.mxu0 0
    %321 = vmatprep.subr.bf16.mxu0 0
    %322 = vmatpush1.bf16.xpose.msra.mxu0 0
    %323 = vmatprep.subr.bf16.mxu0 0
    %324 = vmatpush1.bf16.xpose.msra.mxu0 0
    %325 = vmatprep.subr.bf16.mxu0 0
    %326 = vmatpush1.bf16.xpose.msra.mxu0 0
    %327 = vmatprep.subr.bf16.mxu0 0
    %328 = vmatpush1.bf16.xpose.msra.mxu0 0
    %329 = vmatprep.subr.bf16.mxu0 0
    %330 = vmatpush1.bf16.xpose.msra.mxu0 0
    %331 = vmatprep.subr.bf16.mxu0 0
    %332 = vmatpush1.bf16.xpose.msra.mxu0 0
    %333 = vmatprep.subr.bf16.mxu0 0
    %334 = vmatpush1.bf16.xpose.msra.mxu0 0
    %335 = vmatprep.subr.bf16.mxu0 0
    %336 = vmatpush1.bf16.xpose.msra.mxu0 0
    %337 = vmatprep.subr.bf16.mxu0 0
    %338 = vmatpush1.bf16.xpose.msra.mxu0 0
    %339 = vmatprep.subr.bf16.mxu0 0
    %340 = vmatpush1.bf16.xpose.msra.mxu0 0
    %341 = vmatprep.subr.bf16.mxu0 0
    %342 = vmatpush1.bf16.xpose.msra.mxu0 0
    %343 = vmatprep.mubr.bf16.mxu0 0
    %344 = vmatmul.mubr.bf16.gmra.mrb[0].mxu0 %v309
    %v345 = vpop.f32.mrb[0].mxu0
    %v346 = vadd.f32 %v212, %v345
    %v347 = vpop.f32.mrb[0].mxu0
    %v348 = vpop.f32.mrb[0].mxu0
    %v349 = vadd.f32 %v214, %v348
    %v350 = vpop.f32.mrb[0].mxu0
    %351 = vdwg.mxu0
    %v353 = vsel %vm77, %v178, 0
    %355 = vmatprep.subr.bf16.mxu0 0
    %356 = vmatpush1.bf16.xpose.msra.mxu0 %v221
    %357 = vmatprep.subr.bf16.mxu0 0
    %358 = vmatpush1.bf16.xpose.msra.mxu0 0
    %359 = vmatprep.subr.bf16.mxu0 0
    %360 = vmatpush1.bf16.xpose.msra.mxu0 0
    %361 = vmatprep.subr.bf16.mxu0 0
    %362 = vmatpush1.bf16.xpose.msra.mxu0 0
    %363 = vmatprep.subr.bf16.mxu0 0
    %364 = vmatpush1.bf16.xpose.msra.mxu0 0
    %365 = vmatprep.subr.bf16.mxu0 0
    %366 = vmatpush1.bf16.xpose.msra.mxu0 0
    %367 = vmatprep.subr.bf16.mxu0 0
    %368 = vmatpush1.bf16.xpose.msra.mxu0 0
    %369 = vmatprep.subr.bf16.mxu0 0
    %370 = vmatpush1.bf16.xpose.msra.mxu0 0
    %371 = vmatprep.subr.bf16.mxu0 0
    %372 = vmatpush1.bf16.xpose.msra.mxu0 0
    %373 = vmatprep.subr.bf16.mxu0 0
    %374 = vmatpush1.bf16.xpose.msra.mxu0 0
    %375 = vmatprep.subr.bf16.mxu0 0
    %376 = vmatpush1.bf16.xpose.msra.mxu0 0
    %377 = vmatprep.subr.bf16.mxu0 0
    %378 = vmatpush1.bf16.xpose.msra.mxu0 0
    %379 = vmatprep.subr.bf16.mxu0 0
    %380 = vmatpush1.bf16.xpose.msra.mxu0 0
    %381 = vmatprep.subr.bf16.mxu0 0
    %382 = vmatpush1.bf16.xpose.msra.mxu0 0
    %383 = vmatprep.subr.bf16.mxu0 0
    %384 = vmatpush1.bf16.xpose.msra.mxu0 0
    %385 = vmatprep.subr.bf16.mxu0 0
    %386 = vmatpush1.bf16.xpose.msra.mxu0 0
    %387 = vmatprep.mubr.bf16.mxu0 0
    %388 = vmatmul.mubr.bf16.gmra.mrb[0].mxu0 %v353
    %v389 = vpop.f32.mrb[0].mxu0
    %v390 = vadd.f32 %v212, %v389
    %v391 = vpop.f32.mrb[0].mxu0
    %v392 = vpop.f32.mrb[0].mxu0
    %v393 = vadd.f32 %v214, %v392
    %v394 = vpop.f32.mrb[0].mxu0
    %395 = vdwg.mxu0
    %vm396 = vcmask 130048
    %v397 = vsel %vm396, %v258, -inf
    %398 = vmax.xlane.f32.xlu0 %v397
    %v399 = vpop.xlane.xlu0 %398
    %v400 = vsel %vm396, %v261, -inf
    %401 = vmax.xlane.f32.xlu0 %v400
    %v402 = vpop.xlane.xlu0 %401
    %v403 = vsel %vm396, %v302, -inf
    %404 = vmax.xlane.f32.xlu0 %v403
    %v405 = vpop.xlane.xlu0 %404
    %v406 = vsel %vm396, %v305, -inf
    %407 = vmax.xlane.f32.xlu0 %v406
    %v408 = vpop.xlane.xlu0 %407
    %v409 = vsel %vm396, %v346, -inf
    %410 = vmax.xlane.f32.xlu0 %v409
    %v411 = vpop.xlane.xlu0 %410
    %v412 = vsel %vm396, %v349, -inf
    %413 = vmax.xlane.f32.xlu0 %v412
    %v414 = vpop.xlane.xlu0 %413
    %v415 = vsel %vm396, %v390, -inf
    %416 = vmax.xlane.f32.xlu0 %v415
    %v417 = vpop.xlane.xlu0 %416
    %v418 = vsel %vm396, %v393, -inf
    %419 = vmax.xlane.f32.xlu0 %v418
    %v420 = vpop.xlane.xlu0 %419
    %v421 = vsub.f32 %v258, %v399
    %v422 = vsub.f32 %v261, %v402
    %v423 = vsub.f32 %v302, %v405
    %v424 = vsub.f32 %v305, %v408
    %v425 = vsub.f32 %v346, %v411
    %v426 = vsub.f32 %v349, %v414
    %v427 = vsub.f32 %v390, %v417
    %v428 = vsub.f32 %v393, %v420
    %v429 = vmul.f32 %v421, 1.442695
    %v430 = vpow.pop %v429
    %v431 = vmul.f32 %v422, 1.442695
    %v432 = vpow.pop %v431
    %v433 = vmul.f32 %v423, 1.442695
    %v434 = vpow.pop %v433
    %v435 = vmul.f32 %v424, 1.442695
    %v436 = vpow.pop %v435
    %v437 = vmul.f32 %v425, 1.442695
    %v438 = vpow.pop %v437
    %v439 = vmul.f32 %v426, 1.442695
    %v440 = vpow.pop %v439
    %v441 = vmul.f32 %v427, 1.442695
    %v442 = vpow.pop %v441
    %v443 = vmul.f32 %v428, 1.442695
    %v444 = vpow.pop %v443
    %v445 = vsel %vm396, %v430, 0.0
    %446 = vadd.xlane.f32.xlu0 %v445
    %v447 = vpop.xlane.xlu0 %446
    %v448 = vsel %vm396, %v432, 0.0
    %449 = vadd.xlane.f32.xlu0 %v448
    %v450 = vpop.xlane.xlu0 %449
    %v451 = vsel %vm396, %v434, 0.0
    %452 = vadd.xlane.f32.xlu0 %v451
    %v453 = vpop.xlane.xlu0 %452
    %v454 = vsel %vm396, %v436, 0.0
    %455 = vadd.xlane.f32.xlu0 %v454
    %v456 = vpop.xlane.xlu0 %455
    %v457 = vsel %vm396, %v438, 0.0
    %458 = vadd.xlane.f32.xlu0 %v457
    %v459 = vpop.xlane.xlu0 %458
    %v460 = vsel %vm396, %v440, 0.0
    %461 = vadd.xlane.f32.xlu0 %v460
    %v462 = vpop.xlane.xlu0 %461
    %v463 = vsel %vm396, %v442, 0.0
    %464 = vadd.xlane.f32.xlu0 %v463
    %v465 = vpop.xlane.xlu0 %464
    %v466 = vsel %vm396, %v444, 0.0
    %467 = vadd.xlane.f32.xlu0 %v466
    %v468 = vpop.xlane.xlu0 %467
    %v469 = vrcp.pop %v447
    %v470 = vrcp.pop %v450
    %v471 = vrcp.pop %v453
    %v472 = vrcp.pop %v456
    %v473 = vrcp.pop %v459
    %v474 = vrcp.pop %v462
    %v475 = vrcp.pop %v465
    %v476 = vrcp.pop %v468
    %v477 = vmul.f32 %v447, %v469
    %v478 = vmul.f32 %v450, %v470
    %v479 = vmul.f32 %v453, %v471
    %v480 = vmul.f32 %v456, %v472
    %v481 = vmul.f32 %v459, %v473
    %v482 = vmul.f32 %v462, %v474
    %v483 = vmul.f32 %v465, %v475
    %v484 = vmul.f32 %v468, %v476
    %v485 = vsub.f32 2.0, %v477
    %v486 = vsub.f32 2.0, %v478
    %v487 = vsub.f32 2.0, %v479
    %v488 = vsub.f32 2.0, %v480
    %v489 = vsub.f32 2.0, %v481
    %v490 = vsub.f32 2.0, %v482
    %v491 = vsub.f32 2.0, %v483
    %v492 = vsub.f32 2.0, %v484
    %v493 = vmul.f32 %v469, %v485
    %v494 = vmul.f32 %v470, %v486
    %v495 = vmul.f32 %v471, %v487
    %v496 = vmul.f32 %v472, %v488
    %v497 = vmul.f32 %v473, %v489
    %v498 = vmul.f32 %v474, %v490
    %v499 = vmul.f32 %v475, %v491
    %v500 = vmul.f32 %v476, %v492
    %v501 = vmul.f32 %v430, %v493
    %v502 = vmul.f32 %v432, %v494
    %v503 = vmul.f32 %v434, %v495
    %v504 = vmul.f32 %v436, %v496
    %v505 = vmul.f32 %v438, %v497
    %v506 = vmul.f32 %v440, %v498
    %v507 = vmul.f32 %v442, %v499
    %v508 = vmul.f32 %v444, %v500
    %v509 = vpack.c.bf16 %v502, %v501
    %v510 = vpack.c.bf16 %v504, %v503
    %v511 = vpack.c.bf16 %v506, %v505
    %v512 = vpack.c.bf16 %v508, %v507
    %514 = vrot.lane.b32.xlu0 %v199, 64
    %v515 = vpop.permute.xlu0 %514
    %v518 = vsel %vm396, %v509, 0
    %520 = vmatprep.subr.bf16.mxu0 0
    %521 = vmatpush1.bf16.msra.mxu0 %v515
    %522 = vmatprep.subr.bf16.mxu0 0
    %523 = vmatpush1.bf16.msra.mxu0 0
    %524 = vmatprep.subr.bf16.mxu0 0
    %525 = vmatpush1.bf16.msra.mxu0 0
    %526 = vmatprep.subr.bf16.mxu0 0
    %527 = vmatpush1.bf16.msra.mxu0 0
    %528 = vmatprep.subr.bf16.mxu0 0
    %529 = vmatpush1.bf16.msra.mxu0 0
    %530 = vmatprep.subr.bf16.mxu0 0
    %531 = vmatpush1.bf16.msra.mxu0 0
    %532 = vmatprep.subr.bf16.mxu0 0
    %533 = vmatpush1.bf16.msra.mxu0 0
    %534 = vmatprep.subr.bf16.mxu0 0
    %535 = vmatpush1.bf16.msra.mxu0 0
    %536 = vmatprep.subr.bf16.mxu0 0
    %537 = vmatpush1.bf16.msra.mxu0 0
    %538 = vmatprep.subr.bf16.mxu0 0
    %539 = vmatpush1.bf16.msra.mxu0 0
    %540 = vmatprep.subr.bf16.mxu0 0
    %541 = vmatpush1.bf16.msra.mxu0 0
    %542 = vmatprep.subr.bf16.mxu0 0
    %543 = vmatpush1.bf16.msra.mxu0 0
    %544 = vmatprep.subr.bf16.mxu0 0
    %545 = vmatpush1.bf16.msra.mxu0 0
    %546 = vmatprep.subr.bf16.mxu0 0
    %547 = vmatpush1.bf16.msra.mxu0 0
    %548 = vmatprep.subr.bf16.mxu0 0
    %549 = vmatpush1.bf16.msra.mxu0 0
    %550 = vmatprep.subr.bf16.mxu0 0
    %551 = vmatpush1.bf16.msra.mxu0 0
    %552 = vmatprep.mubr.bf16.mxu0 0
    %553 = vmatmul.mubr.bf16.gmra.mrb[0].mxu0 %v518
    %v554 = vpop.f32.mrb[0].mxu0
    %v555 = vadd.f32 0.0, %v554
    %v556 = vpop.f32.mrb[0].mxu0
    %v557 = vpop.f32.mrb[0].mxu0
    %v558 = vadd.f32 0.0, %v557
    %v559 = vpop.f32.mrb[0].mxu0
    %560 = vdwg.mxu0
    %562 = vrot.lane.b32.xlu0 %v200, 64
    %v563 = vpop.permute.xlu0 %562
    %v566 = vsel %vm396, %v510, 0
    %568 = vmatprep.subr.bf16.mxu0 0
    %569 = vmatpush1.bf16.msra.mxu0 %v563
    %570 = vmatprep.subr.bf16.mxu0 0
    %571 = vmatpush1.bf16.msra.mxu0 0
    %572 = vmatprep.subr.bf16.mxu0 0
    %573 = vmatpush1.bf16.msra.mxu0 0
    %574 = vmatprep.subr.bf16.mxu0 0
    %575 = vmatpush1.bf16.msra.mxu0 0
    %576 = vmatprep.subr.bf16.mxu0 0
    %577 = vmatpush1.bf16.msra.mxu0 0
    %578 = vmatprep.subr.bf16.mxu0 0
    %579 = vmatpush1.bf16.msra.mxu0 0
    %580 = vmatprep.subr.bf16.mxu0 0
    %581 = vmatpush1.bf16.msra.mxu0 0
    %582 = vmatprep.subr.bf16.mxu0 0
    %583 = vmatpush1.bf16.msra.mxu0 0
    %584 = vmatprep.subr.bf16.mxu0 0
    %585 = vmatpush1.bf16.msra.mxu0 0
    %586 = vmatprep.subr.bf16.mxu0 0
    %587 = vmatpush1.bf16.msra.mxu0 0
    %588 = vmatprep.subr.bf16.mxu0 0
    %589 = vmatpush1.bf16.msra.mxu0 0
    %590 = vmatprep.subr.bf16.mxu0 0
    %591 = vmatpush1.bf16.msra.mxu0 0
    %592 = vmatprep.subr.bf16.mxu0 0
    %593 = vmatpush1.bf16.msra.mxu0 0
    %594 = vmatprep.subr.bf16.mxu0 0
    %595 = vmatpush1.bf16.msra.mxu0 0
    %596 = vmatprep.subr.bf16.mxu0 0
    %597 = vmatpush1.bf16.msra.mxu0 0
    %598 = vmatprep.subr.bf16.mxu0 0
    %599 = vmatpush1.bf16.msra.mxu0 0
    %600 = vmatprep.mubr.bf16.mxu0 0
    %601 = vmatmul.mubr.bf16.gmra.mrb[0].mxu0 %v566
    %v602 = vpop.f32.mrb[0].mxu0
    %v603 = vadd.f32 0.0, %v602
    %v604 = vpop.f32.mrb[0].mxu0
    %v605 = vpop.f32.mrb[0].mxu0
    %v606 = vadd.f32 0.0, %v605
    %v607 = vpop.f32.mrb[0].mxu0
    %608 = vdwg.mxu0
    %610 = vrot.lane.b32.xlu0 %v201, 64
    %v611 = vpop.permute.xlu0 %610
    %v614 = vsel %vm396, %v511, 0
    %616 = vmatprep.subr.bf16.mxu0 0
    %617 = vmatpush1.bf16.msra.mxu0 %v611
    %618 = vmatprep.subr.bf16.mxu0 0
    %619 = vmatpush1.bf16.msra.mxu0 0
    %620 = vmatprep.subr.bf16.mxu0 0
    %621 = vmatpush1.bf16.msra.mxu0 0
    %622 = vmatprep.subr.bf16.mxu0 0
    %623 = vmatpush1.bf16.msra.mxu0 0
    %624 = vmatprep.subr.bf16.mxu0 0
    %625 = vmatpush1.bf16.msra.mxu0 0
    %626 = vmatprep.subr.bf16.mxu0 0
    %627 = vmatpush1.bf16.msra.mxu0 0
    %628 = vmatprep.subr.bf16.mxu0 0
    %629 = vmatpush1.bf16.msra.mxu0 0
    %630 = vmatprep.subr.bf16.mxu0 0
    %631 = vmatpush1.bf16.msra.mxu0 0
    %632 = vmatprep.subr.bf16.mxu0 0
    %633 = vmatpush1.bf16.msra.mxu0 0
    %634 = vmatprep.subr.bf16.mxu0 0
    %635 = vmatpush1.bf16.msra.mxu0 0
    %636 = vmatprep.subr.bf16.mxu0 0
    %637 = vmatpush1.bf16.msra.mxu0 0
    %638 = vmatprep.subr.bf16.mxu0 0
    %639 = vmatpush1.bf16.msra.mxu0 0
    %640 = vmatprep.subr.bf16.mxu0 0
    %641 = vmatpush1.bf16.msra.mxu0 0
    %642 = vmatprep.subr.bf16.mxu0 0
    %643 = vmatpush1.bf16.msra.mxu0 0
    %644 = vmatprep.subr.bf16.mxu0 0
    %645 = vmatpush1.bf16.msra.mxu0 0
    %646 = vmatprep.subr.bf16.mxu0 0
    %647 = vmatpush1.bf16.msra.mxu0 0
    %648 = vmatprep.mubr.bf16.mxu0 0
    %649 = vmatmul.mubr.bf16.gmra.mrb[0].mxu0 %v614
    %v650 = vpop.f32.mrb[0].mxu0
    %v651 = vadd.f32 0.0, %v650
    %v652 = vpop.f32.mrb[0].mxu0
    %v653 = vpop.f32.mrb[0].mxu0
    %v654 = vadd.f32 0.0, %v653
    %v655 = vpop.f32.mrb[0].mxu0
    %656 = vdwg.mxu0
    %658 = vrot.lane.b32.xlu0 %v202, 64
    %v659 = vpop.permute.xlu0 %658
    %v662 = vsel %vm396, %v512, 0
    %664 = vmatprep.subr.bf16.mxu0 0
    %665 = vmatpush1.bf16.msra.mxu0 %v659
    %666 = vmatprep.subr.bf16.mxu0 0
    %667 = vmatpush1.bf16.msra.mxu0 0
    %668 = vmatprep.subr.bf16.mxu0 0
    %669 = vmatpush1.bf16.msra.mxu0 0
    %670 = vmatprep.subr.bf16.mxu0 0
    %671 = vmatpush1.bf16.msra.mxu0 0
    %672 = vmatprep.subr.bf16.mxu0 0
    %673 = vmatpush1.bf16.msra.mxu0 0
    %674 = vmatprep.subr.bf16.mxu0 0
    %675 = vmatpush1.bf16.msra.mxu0 0
    %676 = vmatprep.subr.bf16.mxu0 0
    %677 = vmatpush1.bf16.msra.mxu0 0
    %678 = vmatprep.subr.bf16.mxu0 0
    %679 = vmatpush1.bf16.msra.mxu0 0
    %680 = vmatprep.subr.bf16.mxu0 0
    %681 = vmatpush1.bf16.msra.mxu0 0
    %682 = vmatprep.subr.bf16.mxu0 0
    %683 = vmatpush1.bf16.msra.mxu0 0
    %684 = vmatprep.subr.bf16.mxu0 0
    %685 = vmatpush1.bf16.msra.mxu0 0
    %686 = vmatprep.subr.bf16.mxu0 0
    %687 = vmatpush1.bf16.msra.mxu0 0
    %688 = vmatprep.subr.bf16.mxu0 0
    %689 = vmatpush1.bf16.msra.mxu0 0
    %690 = vmatprep.subr.bf16.mxu0 0
    %691 = vmatpush1.bf16.msra.mxu0 0
    %692 = vmatprep.subr.bf16.mxu0 0
    %693 = vmatpush1.bf16.msra.mxu0 0
    %694 = vmatprep.subr.bf16.mxu0 0
    %695 = vmatpush1.bf16.msra.mxu0 0
    %696 = vmatprep.mubr.bf16.mxu0 0
    %697 = vmatmul.mubr.bf16.gmra.mrb[0].mxu0 %v662
    %v698 = vpop.f32.mrb[0].mxu0
    %v699 = vadd.f32 0.0, %v698
    %v700 = vpop.f32.mrb[0].mxu0
    %v701 = vpop.f32.mrb[0].mxu0
    %v702 = vadd.f32 0.0, %v701
    %v703 = vpop.f32.mrb[0].mxu0
    %704 = vdwg.mxu0
    %v705 = vsel %vm77, %v555, 0.0
    %v706 = vsel %vm77, %v603, 0.0
    %v707 = vadd.f32 %v705, %v706
    %v708 = vsel %vm77, %v651, 0.0
    %v709 = vadd.f32 %v707, %v708
    %v710 = vsel %vm77, %v699, 0.0
    %v711 = vadd.f32 %v709, %v710
    %v712 = vsel %vm77, %v558, 0.0
    %v713 = vsel %vm77, %v606, 0.0
    %v714 = vadd.f32 %v712, %v713
    %v715 = vsel %vm77, %v654, 0.0
    %v716 = vadd.f32 %v714, %v715
    %v717 = vsel %vm77, %v702, 0.0
    %v718 = vadd.f32 %v716, %v717
    %v719 = vpack.c.bf16 %v718, %v711
    %v720 = vlaneseq
    %v721 = vshrl.u32 %v720, 7
    %v722 = vsub.s32 1, %v721
    %v723 = vrot.slane %v57, %v722
    %724 = vrot.lane.b32.xlu0 %v73, 32
    %v725 = vpop.permute.xlu0 %724
    %726 = vrot.lane.b32.xlu0 %v74, 32
    %v727 = vpop.permute.xlu0 %726
    %v731 = vsel %vm77, %v719, 0
    %733 = vmatprep.subr.bf16.mxu0 0
    %734 = vmatpush1.bf16.msra.mxu0 %v725
    %735 = vmatprep.subr.bf16.mxu0 0
    %736 = vmatpush1.bf16.msra.mxu0 %v727
    %737 = vmatprep.subr.bf16.mxu0 0
    %738 = vmatpush1.bf16.msra.mxu0 0
    %739 = vmatprep.subr.bf16.mxu0 0
    %740 = vmatpush1.bf16.msra.mxu0 0
    %741 = vmatprep.subr.bf16.mxu0 0
    %742 = vmatpush1.bf16.msra.mxu0 0
    %743 = vmatprep.subr.bf16.mxu0 0
    %744 = vmatpush1.bf16.msra.mxu0 0
    %745 = vmatprep.subr.bf16.mxu0 0
    %746 = vmatpush1.bf16.msra.mxu0 0
    %747 = vmatprep.subr.bf16.mxu0 0
    %748 = vmatpush1.bf16.msra.mxu0 0
    %749 = vmatprep.subr.bf16.mxu0 0
    %750 = vmatpush1.bf16.msra.mxu0 0
    %751 = vmatprep.subr.bf16.mxu0 0
    %752 = vmatpush1.bf16.msra.mxu0 0
    %753 = vmatprep.subr.bf16.mxu0 0
    %754 = vmatpush1.bf16.msra.mxu0 0
    %755 = vmatprep.subr.bf16.mxu0 0
    %756 = vmatpush1.bf16.msra.mxu0 0
    %757 = vmatprep.subr.bf16.mxu0 0
    %758 = vmatpush1.bf16.msra.mxu0 0
    %759 = vmatprep.subr.bf16.mxu0 0
    %760 = vmatpush1.bf16.msra.mxu0 0
    %761 = vmatprep.subr.bf16.mxu0 0
    %762 = vmatpush1.bf16.msra.mxu0 0
    %763 = vmatprep.subr.bf16.mxu0 0
    %764 = vmatpush1.bf16.msra.mxu0 0
    %765 = vmatprep.mubr.bf16.mxu0 0
    %766 = vmatmul.mubr.bf16.gmra.mrb[0].mxu0 %v731
    %v767 = vpop.f32.mrb[0].mxu0
    %v768 = vadd.f32 %v723, %v767
    %v769 = vpop.f32.mrb[0].mxu0
    %v770 = vpop.f32.mrb[0].mxu0
    %v771 = vadd.f32 %v723, %v770
    %v772 = vpop.f32.mrb[0].mxu0
    %773 = vdwg.mxu0
    %v774 = vadd.f32 %v50, %v768
    %v775 = vadd.f32 %v51, %v771
    %v776 = vsel %vm77, %v774, 0.0
    %777 = vadd.xlane.f32.xlu0 %v776
    %v778 = vpop.xlane.xlu0 %777
    %v779 = vsel %vm77, %v775, 0.0
    %780 = vadd.xlane.f32.xlu0 %v779
    %v781 = vpop.xlane.xlu0 %780
    %v782 = vrcp.pop 32.0
    %v783 = vmul.f32 %v778, %v782
    %v784 = vmul.f32 %v781, %v782
    %v785 = vsub.f32 %v774, %v783
    %v786 = vsub.f32 %v775, %v784
    %v787 = vmul.f32 %v785, %v785
    %v788 = vmul.f32 %v786, %v786
    %v789 = vsel %vm77, %v787, 0.0
    %790 = vadd.xlane.f32.xlu0 %v789
    %v791 = vpop.xlane.xlu0 %790
    %v792 = vsel %vm77, %v788, 0.0
    %793 = vadd.xlane.f32.xlu0 %v792
    %v794 = vpop.xlane.xlu0 %793
    %v795 = vmul.f32 %v791, %v782
    %v796 = vmul.f32 %v794, %v782
    %v797 = vadd.f32 %v795, 1e-05
    %v798 = vadd.f32 %v796, 1e-05
    %v799 = vrsqrt.pop %v797
    %v800 = vrsqrt.pop %v798
    %v801 = vmul.f32 %v785, %v799
    %v802 = vmul.f32 %v786, %v800
    %v803 = vlaneseq
    %v804 = vshrl.u32 %v803, 7
    %v805 = vsub.s32 2, %v804
    %v806 = vrot.slane %v57, %v805
    %v807 = vmul.f32 %v801, %v806
    %v808 = vmul.f32 %v802, %v806
    %v809 = vlaneseq
    %v810 = vshrl.u32 %v809, 7
    %v811 = vsub.s32 3, %v810
    %v812 = vrot.slane %v57, %v811
    %v813 = vadd.f32 %v807, %v812
    %v814 = vadd.f32 %v808, %v812
    %v815 = vpack.c.bf16 %v814, %v813
    %v816 = vld [vmem:[#allocation5] sm:$0xf]
    %v817 = vld [vmem:[#allocation5 + $0x4] sm:$0xf]
    %v818 = vld [vmem:[#allocation5 + $0x8] sm:$0xf]
    %v819 = vld [vmem:[#allocation5 + $0xc] sm:$0xf]
    %v820 = vlaneseq
    %v821 = vshrl.u32 %v820, 7
    %v822 = vsub.s32 4, %v821
    %v823 = vrot.slane %v57, %v822
    %v828 = vunpack.c.l.b16 %v816
    %v829 = vunpack.c.l.b16 %v817
    %v830 = vunpack.c.l.b16 %v818
    %v831 = vunpack.c.l.b16 %v819
    %v832 = vpack.c.b16 %v829, %v828
    %v833 = vpack.c.b16 %v831, %v830
    %v837 = vsel %vm77, %v815, 0
    %839 = vmatprep.subr.bf16.mxu0 0
    %840 = vmatpush1.bf16.msra.mxu0 %v832
    %841 = vmatprep.subr.bf16.mxu0 0
    %842 = vmatpush1.bf16.msra.mxu0 %v833
    %843 = vmatprep.subr.bf16.mxu0 0
    %844 = vmatpush1.bf16.msra.mxu0 0
    %845 = vmatprep.subr.bf16.mxu0 0
    %846 = vmatpush1.bf16.msra.mxu0 0
    %847 = vmatprep.subr.bf16.mxu0 0
    %848 = vmatpush1.bf16.msra.mxu0 0
    %849 = vmatprep.subr.bf16.mxu0 0
    %850 = vmatpush1.bf16.msra.mxu0 0
    %851 = vmatprep.subr.bf16.mxu0 0
    %852 = vmatpush1.bf16.msra.mxu0 0
    %853 = vmatprep.subr.bf16.mxu0 0
    %854 = vmatpush1.bf16.msra.mxu0 0
    %855 = vmatprep.subr.bf16.mxu0 0
    %856 = vmatpush1.bf16.msra.mxu0 0
    %857 = vmatprep.subr.bf16.mxu0 0
    %858 = vmatpush1.bf16.msra.mxu0 0
    %859 = vmatprep.subr.bf16.mxu0 0
    %860 = vmatpush1.bf16.msra.mxu0 0
    %861 = vmatprep.subr.bf16.mxu0 0
    %862 = vmatpush1.bf16.msra.mxu0 0
    %863 = vmatprep.subr.bf16.mxu0 0
    %864 = vmatpush1.bf16.msra.mxu0 0
    %865 = vmatprep.subr.bf16.mxu0 0
    %866 = vmatpush1.bf16.msra.mxu0 0
    %867 = vmatprep.subr.bf16.mxu0 0
    %868 = vmatpush1.bf16.msra.mxu0 0
    %869 = vmatprep.subr.bf16.mxu0 0
    %870 = vmatpush1.bf16.msra.mxu0 0
    %871 = vmatprep.mubr.bf16.mxu0 0
    %872 = vmatmul.mubr.bf16.gmra.mrb[0].mxu0 %v837
    %v873 = vpop.f32.mrb[0].mxu0
    %v874 = vadd.f32 %v823, %v873
    %v875 = vpop.f32.mrb[0].mxu0
    %v876 = vpop.f32.mrb[0].mxu0
    %v877 = vadd.f32 %v823, %v876
    %v878 = vpop.f32.mrb[0].mxu0
    %879 = vdwg.mxu0
    %v880 = vmax.f32 %v874, 0.0
    %v881 = vmax.f32 %v877, 0.0
    %v882 = vpack.c.bf16 %v881, %v880
    %v883 = vld [vmem:[%s3] sm:$0xf]
    %v884 = vld [vmem:[%s3 + $0x4] sm:$0xf]
    %v885 = vld [vmem:[%s3 + $0x8] sm:$0xf]
    %v886 = vld [vmem:[%s3 + $0xc] sm:$0xf]
    %v887 = vld [vmem:[%s3 + $0x10] sm:$0xf]
    %v888 = vld [vmem:[%s3 + $0x14] sm:$0xf]
    %v889 = vld [vmem:[%s3 + $0x18] sm:$0xf]
    %v890 = vld [vmem:[%s3 + $0x1c] sm:$0xf]
    %v891 = vlaneseq
    %v892 = vshrl.u32 %v891, 7
    %v893 = vsub.s32 5, %v892
    %v894 = vrot.slane %v57, %v893
    %v903 = vunpack.c.l.b16 %v883
    %v904 = vunpack.c.l.b16 %v884
    %v905 = vunpack.c.l.b16 %v885
    %v906 = vunpack.c.l.b16 %v886
    %v907 = vunpack.c.l.b16 %v887
    %v908 = vunpack.c.l.b16 %v888
    %v909 = vunpack.c.l.b16 %v889
    %v910 = vunpack.c.l.b16 %v890
    %v911 = vpack.c.b16 %v904, %v903
    %v912 = vpack.c.b16 %v906, %v905
    %v913 = vpack.c.b16 %v908, %v907
    %v914 = vpack.c.b16 %v910, %v909
    %vm919 = vcmask 523264
    %v921 = vsel %vm919, %v882, 0
    %923 = vmatprep.subr.bf16.mxu0 0
    %924 = vmatpush1.bf16.msra.mxu0 %v911
    %925 = vmatprep.subr.bf16.mxu0 0
    %926 = vmatpush1.bf16.msra.mxu0 %v912
    %927 = vmatprep.subr.bf16.mxu0 0
    %928 = vmatpush1.bf16.msra.mxu0 %v913
    %929 = vmatprep.subr.bf16.mxu0 0
    %930 = vmatpush1.bf16.msra.mxu0 %v914
    %931 = vmatprep.subr.bf16.mxu0 0
    %932 = vmatpush1.bf16.msra.mxu0 0
    %933 = vmatprep.subr.bf16.mxu0 0
    %934 = vmatpush1.bf16.msra.mxu0 0
    %935 = vmatprep.subr.bf16.mxu0 0
    %936 = vmatpush1.bf16.msra.mxu0 0
    %937 = vmatprep.subr.bf16.mxu0 0
    %938 = vmatpush1.bf16.msra.mxu0 0
    %939 = vmatprep.subr.bf16.mxu0 0
    %940 = vmatpush1.bf16.msra.mxu0 0
    %941 = vmatprep.subr.bf16.mxu0 0
    %942 = vmatpush1.bf16.msra.mxu0 0
    %943 = vmatprep.subr.bf16.mxu0 0
    %944 = vmatpush1.bf16.msra.mxu0 0
    %945 = vmatprep.subr.bf16.mxu0 0
    %946 = vmatpush1.bf16.msra.mxu0 0
    %947 = vmatprep.subr.bf16.mxu0 0
    %948 = vmatpush1.bf16.msra.mxu0 0
    %949 = vmatprep.subr.bf16.mxu0 0
    %950 = vmatpush1.bf16.msra.mxu0 0
    %951 = vmatprep.subr.bf16.mxu0 0
    %952 = vmatpush1.bf16.msra.mxu0 0
    %953 = vmatprep.subr.bf16.mxu0 0
    %954 = vmatpush1.bf16.msra.mxu0 0
    %955 = vmatprep.mubr.bf16.mxu0 0
    %956 = vmatmul.mubr.bf16.gmra.mrb[0].mxu0 %v921
    %v957 = vpop.f32.mrb[0].mxu0
    %v958 = vadd.f32 %v894, %v957
    %v959 = vpop.f32.mrb[0].mxu0
    %v960 = vpop.f32.mrb[0].mxu0
    %v961 = vadd.f32 %v894, %v960
    %v962 = vpop.f32.mrb[0].mxu0
    %963 = vdwg.mxu0
    %v964 = vadd.f32 %v813, %v958
    %v965 = vadd.f32 %v814, %v961
    %v966 = vsel %vm77, %v964, 0.0
    %967 = vadd.xlane.f32.xlu0 %v966
    %v968 = vpop.xlane.xlu0 %967
    %v969 = vsel %vm77, %v965, 0.0
    %970 = vadd.xlane.f32.xlu0 %v969
    %v971 = vpop.xlane.xlu0 %970
    %v972 = vmul.f32 %v968, %v782
    %v973 = vmul.f32 %v971, %v782
    %v974 = vsub.f32 %v964, %v972
    %v975 = vsub.f32 %v965, %v973
    %v976 = vmul.f32 %v974, %v974
    %v977 = vmul.f32 %v975, %v975
    %v978 = vsel %vm77, %v976, 0.0
    %979 = vadd.xlane.f32.xlu0 %v978
    %v980 = vpop.xlane.xlu0 %979
    %v981 = vsel %vm77, %v977, 0.0
    %982 = vadd.xlane.f32.xlu0 %v981
    %v983 = vpop.xlane.xlu0 %982
    %v984 = vmul.f32 %v980, %v782
    %v985 = vmul.f32 %v983, %v782
    %v986 = vadd.f32 %v984, 1e-05
    %v987 = vadd.f32 %v985, 1e-05
    %v988 = vrsqrt.pop %v986
    %v989 = vrsqrt.pop %v987
    %v990 = vmul.f32 %v974, %v988
    %v991 = vmul.f32 %v975, %v989
    %v992 = vlaneseq
    %v993 = vshrl.u32 %v992, 7
    %v994 = vsub.s32 6, %v993
    %v995 = vrot.slane %v57, %v994
    %v996 = vmul.f32 %v990, %v995
    %v997 = vmul.f32 %v991, %v995
    %v998 = vlaneseq
    %v999 = vshrl.u32 %v998, 7
    %v1000 = vsub.s32 7, %v999
    %v1001 = vrot.slane %v57, %v1000
    %v1002 = vadd.f32 %v996, %v1001
    %v1003 = vadd.f32 %v997, %v1001
    %1004 = vst.msk [vmem:[#allocation7] sm:$0xff] %vm77, %v1002
    %1005 = vst.msk [vmem:[#allocation7 + $0x8] sm:$0xff] %vm77, %v1003
    // Predicated region
    $region30: #{tpu_custom_call.1} parent=1 // pred_check
      _
    $region31: #{tpu_custom_call.1} parent=1 // pred_check_branch
      %1007 = sbr.rel (0) target = $region33
    $region32: #{tpu_custom_call.1} parent=1 // pred_region
      %s1009 = ssub.s32 256, 256
      %1010 = vsyncadd [#allocation4], %s1009
      %s1011 = sshll.u32 [#allocation7], 4
      %s1012 = int_to_ptr.vmem [resolvable:$true] %s1011
      %1017 = dma.vmem_to_hbm [thread:$0]  %s1012, 256, %s5, [#allocation4], 128, 128, 8
    $region33: #{tpu_custom_call.1} parent=1 // pred_fallthru
      _
    // Predicated region
    $region34: #{tpu_custom_call.1} parent=1 // pred_check
      _
    $region35: #{tpu_custom_call.1} parent=1 // pred_check_branch
      %1019 = sbr.rel (0) target = $region37
    $region36: #{tpu_custom_call.1} parent=1 // pred_region
      %1020 = dma.done [#allocation4], 256
    $region37: #{tpu_custom_call.1} parent=1 // pred_fallthru
      _
    %1021 = vsyncpa [#allocation3], 1
    %1022 = vsyncpa [#allocation6], 1
    %1023 = vsyncpa [#allocation4], 1

</llo_original>
